<compile_context>
chip_gen: v5e
topology: v5e:2x2
jax: 0.10.0
libtpu: 0.0.40
codegen_flags: <defaults>
</compile_context>

<pallas_src>
import functools

import jax
import jax.numpy as jnp
from jax import lax
from jax.experimental import pallas as pl
from jax.experimental.pallas import tpu as pltpu


def _round_up(x, m):
    return (x + m - 1) // m * m


def _choose_tiles(N, M, D, dtype):
    """Pick (tm, tn, tk) tiles per the perf review.

    tm: sublane dim of the output / X tile -> multiple of the dtype packing
        (16 bf16 / 8 f32) unless equal to the full N.
    tn, tk: lane dims -> multiples of 256 (full v6e/v7x MXU tiles) unless
        equal to the full M / D, so small problems need no padding at all.
    """
    sub = 16 if dtype == jnp.bfloat16 else 8
    cap_mn = 1024                                # 1024x1024 f32 out = 4 MiB
    cap_k = 1024 if dtype == jnp.bfloat16 else 512

    tm = N if N <= cap_mn else cap_mn
    tn = M if M <= cap_mn else cap_mn
    tk = D if D <= cap_k else cap_k

    # v7x megacore: if the whole output fits one tile, split a parallel axis
    # so both TensorCores get grid work (no-op on v5e/v6e).
    if pl.cdiv(N, tm) * pl.cdiv(M, tn) == 1:
        if N >= 2 * sub:
            tm = _round_up(pl.cdiv(N, 2), sub)
        elif M >= 2 * 128:
            tn = _round_up(pl.cdiv(M, 2), 128)
    return tm, tn, tk


def _rbf_kernel(gamma_ref, x_ref, y_ref, xx_ref, yy_ref, o_ref, *, apply_exp):
    """One (i, j) output tile, accumulated over the k (feature) grid axis.

    The f32 output block doubles as the accumulator: its index_map ignores k,
    so it stays resident in VMEM across the reduction (no scratch buffer, no
    extra VMEM->VMEM copy at finalize).
    """
    k = pl.program_id(2)

    @pl.when(k == 0)
    def _():
        o_ref[...] = jnp.zeros_like(o_ref)

    # Contract on the LAST dim of both tiles -> pure MXU, no Y transpose.
    o_ref[...] += lax.dot_general(
        x_ref[...],
        y_ref[...],
        dimension_numbers=(((1,), (1,)), ((), ())),
        preferred_element_type=jnp.float32,
    )

    @pl.when(k == pl.num_programs(2) - 1)
    def _():
        d = xx_ref[...] + yy_ref[...] - 2.0 * o_ref[...]
        # Guard tiny negatives from floating-point cancellation.
        d = jnp.maximum(d, 0.0)
        if apply_exp:
            o_ref[...] = jnp.exp(-gamma_ref[0] * d)
        else:
            o_ref[...] = d


def _pairwise_call(X, Y, xx, yy, gamma_arr, apply_exp):
    N, D = X.shape
    M = Y.shape[0]
    tm, tn, tk = _choose_tiles(N, M, D, X.dtype)

    # Only the contraction dim needs zero padding (zeros add nothing to the
    # dot product).  N / M stay unpadded: OOB rows/cols of partial tiles only
    # touch output elements that are masked away at writeback.
    Dp = _round_up(D, tk)
    if Dp != D:
        X = jnp.pad(X, ((0, 0), (0, Dp - D)))
        Y = jnp.pad(Y, ((0, 0), (0, Dp - D)))

    grid = (pl.cdiv(N, tm), pl.cdiv(M, tn), Dp // tk)
    kernel = functools.partial(_rbf_kernel, apply_exp=apply_exp)

    return pl.pallas_call(
        kernel,
        out_shape=jax.ShapeDtypeStruct((N, M), jnp.float32),
        grid_spec=pltpu.PrefetchScalarGridSpec(
            num_scalar_prefetch=1,          # gamma (f32 scalar in SMEM)
            grid=grid,
            in_specs=[
                pl.BlockSpec((tm, tk), lambda i, j, k, g: (i, k)),  # X tile
                pl.BlockSpec((tn, tk), lambda i, j, k, g: (j, k)),  # Y tile
                pl.BlockSpec((tm, 1), lambda i, j, k, g: (i, 0)),   # ||x||^2
                pl.BlockSpec((1, tn), lambda i, j, k, g: (0, j)),   # ||y||^2
            ],
            out_specs=pl.BlockSpec((tm, tn), lambda i, j, k, g: (i, j)),
        ),
        compiler_params=pltpu.CompilerParams(
            dimension_semantics=("parallel", "parallel", "arbitrary"),
        ),
    )(gamma_arr, X, Y, xx, yy)


def rbf_forward(X, Y, sigma=None):
    """Pallas implementation of RBF.forward(X, Y)."""
    N, D = X.shape
    M, D2 = Y.shape
    assert D == D2, "feature dims must match"

    # Keep bf16/f32 inputs as-is (bf16 halves HBM traffic; MXU accumulates in
    # f32); other dtypes fall back to f32.
    if X.dtype not in (jnp.bfloat16, jnp.float32):
        X = X.astype(jnp.float32)
    if Y.dtype not in (jnp.bfloat16, jnp.float32):
        Y = Y.astype(jnp.float32)

    # Hoisted f32 row norms (O((N+M)*D) total; keeps the k-loop pure MXU).
    Xf = X.astype(jnp.float32)
    Yf = Y.astype(jnp.float32)
    xx = jnp.sum(Xf * Xf, axis=-1, keepdims=True)        # (N, 1)
    yy = jnp.sum(Yf * Yf, axis=-1, keepdims=True).T      # (1, M)

    if sigma is not None:
        # gamma goes through scalar prefetch: works for traced sigma, and
        # different sigma values reuse the same compiled kernel.
        sigma_f = jnp.asarray(sigma, jnp.float32)
        gamma = (1.0 / (1e-8 + 2.0 * sigma_f ** 2)).astype(jnp.float32)
        gamma_arr = jnp.reshape(gamma, (1,))
        return _pairwise_call(X, Y, xx, yy, gamma_arr, apply_exp=True)

    # --- sigma=None: median bandwidth ---------------------------------
    # dnorm2 comes from the Pallas kernel; median / gamma are JAX glue
    # (mirrors the host-side numpy median of the PyTorch module).  The
    # elementwise exp has zero data reuse, so it is left to XLA.
    dummy_gamma = jnp.zeros((1,), jnp.float32)
    dnorm2 = _pairwise_call(X, Y, xx, yy, dummy_gamma, apply_exp=False)
    # TODO(synk): jnp.median sorts the full N*M matrix on device; for large
    # particle counts an approximate / sampled median would be cheaper.
    h = jnp.median(dnorm2) / (2.0 * jnp.log(jnp.float32(N) + 1.0))
    sigma_val = jnp.sqrt(h)
    gamma = 1.0 / (1e-8 + 2.0 * sigma_val ** 2)
    return jnp.exp(-gamma * dnorm2)


def _reference(X, Y, sigma=None):
    # Pure-JAX reference mirroring the PyTorch forward.
    Xf = X.astype(jnp.float32)
    Yf = Y.astype(jnp.float32)
    XY = Xf @ Yf.T
    xx = jnp.sum(Xf * Xf, axis=-1, keepdims=True)
    yy = jnp.sum(Yf * Yf, axis=-1, keepdims=True)
    dnorm2 = -2.0 * XY + xx + yy.T
    if sigma is None:
        h = jnp.median(dnorm2) / (2.0 * jnp.log(X.shape[0] + 1.0))
        sigma = jnp.sqrt(h)
    gamma = 1.0 / (1e-8 + 2.0 * sigma ** 2)
    return jnp.exp(-gamma * dnorm2)


if __name__ == "__main__":
    key = jax.random.PRNGKey(0)
    kx, ky = jax.random.split(key)
    N, M, D = 8, 8, 32  # small particle set, hidden dim 32
    X = jax.random.normal(kx, (N, D), dtype=jnp.float32)
    Y = jax.random.normal(ky, (M, D), dtype=jnp.float32)

    # Median-bandwidth path (sigma=None): Pallas dnorm2 + glue median/exp.
    K = jax.block_until_ready(rbf_forward(X, Y, sigma=None))
    K_ref = _reference(X, Y, sigma=None)
    assert K.shape == (N, M)
    assert jnp.allclose(K, K_ref, atol=1e-5, rtol=1e-5), "median-path mismatch"

    # Fixed-sigma path: exp fused into the matmul epilogue (single call),
    # gamma delivered via scalar prefetch.
    K2 = jax.block_until_ready(rbf_forward(X, Y, sigma=1.0))
    K2_ref = _reference(X, Y, sigma=1.0)
    assert jnp.allclose(K2, K2_ref, atol=1e-5, rtol=1e-5), "fused-path mismatch"

    print("KERNEL_OK")
</pallas_src>

<mosaic_0001>
module attributes {stable_mosaic.version = 11 : i64} {
  func.func @_rbf_kernel(%arg0: i32, %arg1: i32, %arg2: i32, %arg3: memref<1xf32, #tpu.memory_space<smem>>, %arg4: memref<8x32xf32, #tpu.memory_space<vmem>>, %arg5: memref<8x32xf32, #tpu.memory_space<vmem>>, %arg6: memref<8x1xf32, #tpu.memory_space<vmem>>, %arg7: memref<1x8xf32, #tpu.memory_space<vmem>>, %arg8: memref<8x8xf32, #tpu.memory_space<vmem>>) attributes {dimension_semantics = [#tpu.dimension_semantics<parallel>, #tpu.dimension_semantics<parallel>, #tpu.dimension_semantics<arbitrary>], iteration_bounds = array<i64: 1, 1, 1>, scalar_prefetch = 1 : i64, scratch_operands = 0 : i64, tpu.core_type = #tpu.core_type<tc>, window_params = [{transform_indices = @transform_0, window_bounds = array<i64: 8, 32>}, {transform_indices = @transform_1, window_bounds = array<i64: 8, 32>}, {transform_indices = @transform_2, window_bounds = array<i64: 8, 1>}, {transform_indices = @transform_3, window_bounds = array<i64: 1, 8>}, {transform_indices = @transform_4, window_bounds = array<i64: 8, 8>}]} {
    %c0_i32 = arith.constant 0 : i32
    %0 = arith.cmpi eq, %arg2, %c0_i32 : i32
    %1 = arith.extui %0 : i1 to i32
    %c0_i32_0 = arith.constant 0 : i32
    %2 = arith.cmpi ne, %1, %c0_i32_0 : i32
    scf.if %2 {
      %cst_10 = arith.constant 0.000000e+00 : f32
      %12 = vector.broadcast %cst_10 : f32 to vector<8x8xf32>
      %c0_11 = arith.constant 0 : index
      %c0_12 = arith.constant 0 : index
      %13 = vector.load %arg8[%c0_11, %c0_12] : memref<8x8xf32, #tpu.memory_space<vmem>>, vector<8x8xf32>
      tpu.vector_store %arg8[%c0_11, %c0_12], %12 {strides = array<i32>} : memref<8x8xf32, #tpu.memory_space<vmem>>, vector<8x8xf32>,
    } else {
    }
    %c0 = arith.constant 0 : index
    %c0_1 = arith.constant 0 : index
    %3 = vector.load %arg8[%c0, %c0_1] : memref<8x8xf32, #tpu.memory_space<vmem>>, vector<8x8xf32>
    %c0_2 = arith.constant 0 : index
    %c0_3 = arith.constant 0 : index
    %4 = vector.load %arg4[%c0_2, %c0_3] : memref<8x32xf32, #tpu.memory_space<vmem>>, vector<8x32xf32>
    %c0_4 = arith.constant 0 : index
    %c0_5 = arith.constant 0 : index
    %5 = vector.load %arg5[%c0_4, %c0_5] : memref<8x32xf32, #tpu.memory_space<vmem>>, vector<8x32xf32>
    %cst = arith.constant dense<0.000000e+00> : vector<8x8xf32>
    %6 = tpu.matmul %4, %5, %cst {dimension_numbers = #tpu.dot_dimension_numbers<[1], [1], [0], [0], [0, 0, 1, 0], [], []>} : vector<8x32xf32>, vector<8x32xf32>, vector<8x8xf32> -> vector<8x8xf32>
    %7 = arith.addf %3, %6 : vector<8x8xf32>
    %c0_6 = arith.constant 0 : index
    %c0_7 = arith.constant 0 : index
    %8 = vector.load %arg8[%c0_6, %c0_7] : memref<8x8xf32, #tpu.memory_space<vmem>>, vector<8x8xf32>
    tpu.vector_store %arg8[%c0_6, %c0_7], %7 {strides = array<i32>} : memref<8x8xf32, #tpu.memory_space<vmem>>, vector<8x8xf32>,
    %c0_i32_8 = arith.constant 0 : i32
    %9 = arith.cmpi eq, %arg2, %c0_i32_8 : i32
    %10 = arith.extui %9 : i1 to i32
    %c0_i32_9 = arith.constant 0 : i32
    %11 = arith.cmpi ne, %10, %c0_i32_9 : i32
    scf.if %11 {
      %c0_10 = arith.constant 0 : index
      %c0_11 = arith.constant 0 : index
      %12 = vector.load %arg6[%c0_10, %c0_11] : memref<8x1xf32, #tpu.memory_space<vmem>>, vector<8x1xf32>
      %c0_12 = arith.constant 0 : index
      %c0_13 = arith.constant 0 : index
      %13 = vector.load %arg7[%c0_12, %c0_13] : memref<1x8xf32, #tpu.memory_space<vmem>>, vector<1x8xf32>
      %14 = vector.broadcast %12 : vector<8x1xf32> to vector<8x8xf32>
      %15 = vector.broadcast %13 : vector<1x8xf32> to vector<8x8xf32>
      %16 = arith.addf %14, %15 : vector<8x8xf32>
      %c0_14 = arith.constant 0 : index
      %c0_15 = arith.constant 0 : index
      %17 = vector.load %arg8[%c0_14, %c0_15] : memref<8x8xf32, #tpu.memory_space<vmem>>, vector<8x8xf32>
      %cst_16 = arith.constant 2.000000e+00 : f32
      %18 = vector.broadcast %cst_16 : f32 to vector<8x8xf32>
      %19 = arith.mulf %18, %17 : vector<8x8xf32>
      %20 = arith.subf %16, %19 : vector<8x8xf32>
      %cst_17 = arith.constant 0.000000e+00 : f32
      %21 = vector.broadcast %cst_17 : f32 to vector<8x8xf32>
      %22 = arith.maximumf %20, %21 : vector<8x8xf32>
      %c0_18 = arith.constant 0 : index
      %c0_19 = arith.constant 0 : index
      %23 = vector.load %arg8[%c0_18, %c0_19] : memref<8x8xf32, #tpu.memory_space<vmem>>, vector<8x8xf32>
      tpu.vector_store %arg8[%c0_18, %c0_19], %22 {strides = array<i32>} : memref<8x8xf32, #tpu.memory_space<vmem>>, vector<8x8xf32>,
    } else {
    }
    return
  }
  func.func @transform_0(%arg0: i32, %arg1: i32, %arg2: i32, %arg3: memref<1xf32, #tpu.memory_space<smem>>) -> (i32, i32) {
    %c0_i32 = arith.constant 0 : i32
    return %arg0, %arg2 : i32, i32
  }
  func.func @transform_1(%arg0: i32, %arg1: i32, %arg2: i32, %arg3: memref<1xf32, #tpu.memory_space<smem>>) -> (i32, i32) {
    %c0_i32 = arith.constant 0 : i32
    return %arg1, %arg2 : i32, i32
  }
  func.func @transform_2(%arg0: i32, %arg1: i32, %arg2: i32, %arg3: memref<1xf32, #tpu.memory_space<smem>>) -> (i32, i32) {
    %c0_i32 = arith.constant 0 : i32
    %c0_i32_0 = arith.constant 0 : i32
    return %arg0, %c0_i32 : i32, i32
  }
  func.func @transform_3(%arg0: i32, %arg1: i32, %arg2: i32, %arg3: memref<1xf32, #tpu.memory_space<smem>>) -> (i32, i32) {
    %c0_i32 = arith.constant 0 : i32
    %c0_i32_0 = arith.constant 0 : i32
    return %c0_i32, %arg1 : i32, i32
  }
  func.func @transform_4(%arg0: i32, %arg1: i32, %arg2: i32, %arg3: memref<1xf32, #tpu.memory_space<smem>>) -> (i32, i32) {
    %c0_i32 = arith.constant 0 : i32
    return %arg0, %arg1 : i32, i32
  }
}

</mosaic_0001>

<llo_original>
// kernel: tpu_custom_call.1
$region0: #{tpu_custom_call.1}
  #allocation0 [shape = 'u32[]', space=smem, size = 0x4, offset = 0x4, fixed_abs, tag = 'smem constant byte address 0x4 - core index']
  #allocation1 [shape = 'u32[72,128]{1,0:T(1,128)}', space=vmem, size = 0x9000, scoped, tag = 'internal scratch']
  #allocation2 [shape = 's32[1]{0}', space=sflag, size = 0x4, scoped, tag = 'scoped memory for tpu_custom_call.1']
  #allocation3 [shape = 'f32[1]{0:T(128)S(6)}', space=smem, size = 0x200, scoped, tag = 'prefetched SMEM operand 0']
  %s0 = inlined_call_operand.<no memory space> [shape: f32[1], index: 0, kind: input, shape index: {}]
  %s1 = inlined_call_operand.vmem [shape: f32[8,32], index: 1, kind: input, shape index: {}]
  %s2 = inlined_call_operand.hbm [shape: f32[8,32], index: 2, kind: input, shape index: {}]
  %s3 = inlined_call_operand.vmem [shape: f32[8,1], index: 3, kind: input, shape index: {}]
  %s4 = inlined_call_operand.vmem [shape: f32[1,8], index: 4, kind: input, shape index: {}]
  %s5 = inlined_call_operand.hbm [shape: f32[8,8], index: 5, kind: output, shape index: {}]
  %s6 = sld [smem:[#allocation0]]
  $region38: #{tpu_custom_call.1} parent=0
    _
  %s8 = ssub.s32 1, %s6
  %s9 = scalar_select 0, %s8, %s6
  %10 = sst [smem:[#allocation3]] %s0
  $region1: #{tpu_custom_call.1} parent=0
    #allocation4 [shape = 'u8[4096]{0}', space=vmem, size = 0x1000, scoped, tag = 'input window, operand 2, single buffered']
    #allocation5 [shape = 's32[1]{0}', space=sflag, size = 0x4, scoped, tag = 'scoped memory for tpu_custom_call.1']
    #allocation6 [shape = 's32[1]{0}', space=sflag, size = 0x4, scoped, tag = 'scoped memory for tpu_custom_call.1']
    #allocation7 [shape = 'u8[4096]{0}', space=vmem, size = 0x1000, scoped, tag = 'output window, operand 0, single buffered']
    %11 = vsyncpa [#allocation5], 0
    %12 = vsyncpa [#allocation6], 0
    // Predicated region
    $region2: #{tpu_custom_call.1} parent=1 // pred_check
      _
    $region3: #{tpu_custom_call.1} parent=1 // pred_check_branch
      %14 = sbr.rel (0) target = $region5
    $region4: #{tpu_custom_call.1} parent=1 // pred_region
      _
    $region5: #{tpu_custom_call.1} parent=1 // pred_fallthru
      _
    // Predicated region
    $region6: #{tpu_custom_call.1} parent=1 // pred_check
      _
    $region7: #{tpu_custom_call.1} parent=1 // pred_check_branch
      %16 = sbr.rel (0) target = $region9
    $region8: #{tpu_custom_call.1} parent=1 // pred_region
      %18 = vsyncadd [#allocation5], 0
      %s20 = sshll.u32 %s2, 4
      %s21 = int_to_ptr.hbm [resolvable:$true] %s20
      %s22 = sshll.u32 [#allocation4], 4
      %s23 = int_to_ptr.vmem [resolvable:$true] %s22
      %25 = dma.hbm_to_vmem [thread:$0]  %s21, 128, %s23, [#allocation5]
    $region9: #{tpu_custom_call.1} parent=1 // pred_fallthru
      _
    // Predicated region
    $region10: #{tpu_custom_call.1} parent=1 // pred_check
      _
    $region11: #{tpu_custom_call.1} parent=1 // pred_check_branch
      %27 = sbr.rel (0) target = $region13
    $region12: #{tpu_custom_call.1} parent=1 // pred_region
      _
    $region13: #{tpu_custom_call.1} parent=1 // pred_fallthru
      _
    // Predicated region
    $region14: #{tpu_custom_call.1} parent=1 // pred_check
      _
    $region15: #{tpu_custom_call.1} parent=1 // pred_check_branch
      %29 = sbr.rel (0) target = $region17
    $region16: #{tpu_custom_call.1} parent=1 // pred_region
      _
    $region17: #{tpu_custom_call.1} parent=1 // pred_fallthru
      _
    // Predicated region
    $region18: #{tpu_custom_call.1} parent=1 // pred_check
      _
    $region19: #{tpu_custom_call.1} parent=1 // pred_check_branch
      %31 = sbr.rel (0) target = $region21
    $region20: #{tpu_custom_call.1} parent=1 // pred_region
      %33 = dma.done [#allocation5], 128
    $region21: #{tpu_custom_call.1} parent=1 // pred_fallthru
      _
    %p34 = scmp.eq.s32.totalorder 0, 0
    // Predicated region
    $region22: #{tpu_custom_call.1} parent=1 // pred_check
      %p35 = pneg %p34
    $region23: #{tpu_custom_call.1} parent=1 // pred_check_branch
      %37 = sbr.rel (%p35) target = $region25
    $region24: #{tpu_custom_call.1} parent=1 // pred_region
      %vm38 = vcmask 64512
      %39 = vst.msk [vmem:[#allocation7] sm:$0xff] %vm38, 0.0
    $region25: #{tpu_custom_call.1} parent=1 // pred_fallthru
      _
    %v40 = vld [vmem:[#allocation7] sm:$0xff]
    %v41 = vld [vmem:[%s1] sm:$0xff]
    %v42 = vld [vmem:[#allocation4] sm:$0xff]
    %vm43 = vcmask 261120
    %v45 = vsel %vm43, %v41, 0
    %v48 = vsel %vm43, %v42, 0
    %50 = vmatpush.xpose.msra.mxu0 0.0
    %51 = vmatpush.xpose.msra.mxu0 0.0
    %52 = vmatpush.xpose.msra.mxu0 0.0
    %53 = vmatpush.xpose.msra.mxu0 0.0
    %54 = vmatpush.xpose.msra.mxu0 0.0
    %55 = vmatpush.xpose.msra.mxu0 0.0
    %56 = vmatpush.xpose.msra.mxu0 0.0
    %57 = vmatpush.xpose.msra.mxu0 0.0
    %58 = vmatpush.xpose.msra.mxu0 0.0
    %59 = vmatpush.xpose.msra.mxu0 0.0
    %60 = vmatpush.xpose.msra.mxu0 0.0
    %61 = vmatpush.xpose.msra.mxu0 0.0
    %62 = vmatpush.xpose.msra.mxu0 0.0
    %63 = vmatpush.xpose.msra.mxu0 0.0
    %64 = vmatpush.xpose.msra.mxu0 0.0
    %65 = vmatpush.xpose.msra.mxu0 %v48
    %66 = vmatmul.f32.gmra.mxu0 %v45
    %v67 = vpop.f32.mrf.mxu0
    %v68 = vadd.f32 0.0, %v67
    %69 = vdwg.mxu0
    %v70 = vadd.f32 %v40, %v68
    %vm71 = vcmask 64512
    %72 = vst.msk [vmem:[#allocation7] sm:$0xff] %vm71, %v70
    // Predicated region
    $region26: #{tpu_custom_call.1} parent=1 // pred_check
      %p73 = pneg %p34
    $region27: #{tpu_custom_call.1} parent=1 // pred_check_branch
      %75 = sbr.rel (%p73) target = $region29
    $region28: #{tpu_custom_call.1} parent=1 // pred_region
      %v76 = vld [vmem:[%s3] sm:$0xff]
      %v77 = vld [vmem:[%s4] sm:$0x1]
      %79 = vset.pattern.permute.xlu0 0
      %80 = vperm.xlu0 %79, %v76
      %v81 = vpop.permute.xlu0 %80
      %v84 = vperm.slane %v77, 0
      %v86 = vadd.f32 %v81, %v84
      %v87 = vld [vmem:[#allocation7] sm:$0xff]
      %v88 = vmul.f32 %v87, 2.0
      %v89 = vsub.f32 %v86, %v88
      %v90 = vmax.f32 %v89, 0.0
      %91 = vst.msk [vmem:[#allocation7] sm:$0xff] %vm71, %v90
    $region29: #{tpu_custom_call.1} parent=1 // pred_fallthru
      _
    // Predicated region
    $region30: #{tpu_custom_call.1} parent=1 // pred_check
      _
    $region31: #{tpu_custom_call.1} parent=1 // pred_check_branch
      %93 = sbr.rel (0) target = $region33
    $region32: #{tpu_custom_call.1} parent=1 // pred_region
      %95 = vsyncadd [#allocation6], 0
      %s97 = sshll.u32 [#allocation7], 4
      %s98 = int_to_ptr.vmem [resolvable:$true] %s97
      %s99 = sshll.u32 %s5, 4
      %s100 = int_to_ptr.hbm [resolvable:$true] %s99
      %102 = dma.vmem_to_hbm [thread:$0]  %s98, 128, %s100, [#allocation6]
    $region33: #{tpu_custom_call.1} parent=1 // pred_fallthru
      _
    // Predicated region
    $region34: #{tpu_custom_call.1} parent=1 // pred_check
      _
    $region35: #{tpu_custom_call.1} parent=1 // pred_check_branch
      %104 = sbr.rel (0) target = $region37
    $region36: #{tpu_custom_call.1} parent=1 // pred_region
      %106 = dma.done [#allocation6], 128
    $region37: #{tpu_custom_call.1} parent=1 // pred_fallthru
      _
    %107 = vsyncpa [#allocation5], 1
    %108 = vsyncpa [#allocation6], 1

</llo_original>
